<compile_context>
chip_gen: v5e
topology: v5e:2x2
jax: 0.10.0
libtpu: 0.0.40
codegen_flags: <defaults>
</compile_context>

<pallas_src>
import jax
import jax.numpy as jnp
from jax.experimental import pallas as pl
from jax.experimental.pallas import tpu as pltpu


def _round_up(v, m):
    return -(-v // m) * m


def _linear_kernel(x_ref, w_ref, b_ref, o_ref):
    # x_ref: (TB, D); w_ref: (D, C) already transposed to MXU-native layout;
    # b_ref: (1, C); o_ref: (TB, C).  f32 accumulation on the MXU.
    acc = jnp.dot(x_ref[...], w_ref[...], preferred_element_type=jnp.float32)
    o_ref[...] = (acc + b_ref[...]).astype(o_ref.dtype)


def _vmem_capacity_bytes():
    # Generation-aware VMEM capacity (64 MiB/TC on v7x, 128 MiB on v5e/v6e).
    try:
        info = pltpu.get_tpu_info()
        cap = getattr(info, "vmem_capacity_bytes", None)
        if cap:
            return int(cap)
    except Exception:
        pass
    return 64 << 20  # conservative fallback (v7x per-TensorCore size)


@jax.jit
def logistic_regression_forward(x, weight, bias):
    """Forward of nn.Linear(D, C): logits = x @ W.T + b.

    x: (B, D) f32; weight: (C, D) f32 (PyTorch layout); bias: (C,) f32.
    Returns raw logits (B, C) f32, matching the reference module.
    """
    B, D = x.shape
    C = weight.shape[0]
    itemsize = jnp.dtype(x.dtype).itemsize

    # ---------- tiny-problem fast path: one grid-less step, fully VMEM-resident.
    # Grid machinery, class padding and the output slice would be pure overhead.
    if B <= 128 and (B * D + D * C + B * C) * itemsize <= (2 << 20):
        w_t = weight.T                      # (D, C): transpose fused by XLA
        b2 = bias.reshape(1, C)
        return pl.pallas_call(
            _linear_kernel,
            out_shape=jax.ShapeDtypeStruct((B, C), x.dtype),
        )(x, w_t, b2)

    # ---------- general batch-tiled path ----------
    # Lane-dense output stores: pad classes to a multiple of 128 lanes.
    C_pad = _round_up(C, 128)
    # Pre-transposed, class-padded weight: pad + transpose fuse into the single
    # HBM copy, so the kernel's jnp.dot needs no in-loop relayout of the RHS.
    w_t = jnp.pad(weight, ((0, C_pad - C), (0, 0))).T            # (D, C_pad)
    b_p = jnp.pad(bias, (0, C_pad - C)).reshape(1, C_pad)        # (1, C_pad)

    cap = _vmem_capacity_bytes()
    vmem_cap = int(0.62 * cap)

    # Batch tile: ~2 MiB per x/out block (amortizes ~0.35 us per-step overhead),
    # at least 2 grid steps so the "parallel" axis can shard across v7x's 2 TCs,
    # clamped so double-buffered x/out tiles + resident W/b fit the VMEM budget.
    tb = (2 << 20) // (itemsize * max(D, C_pad))
    tb = max(tb, 256)
    tb = min(tb, _round_up(pl.cdiv(B, 2), 8))
    resident = 2 * (D * C_pad + C_pad) * itemsize       # W^T + bias (default-buffered)
    per_row = 2 * (D + C_pad) * itemsize                # x tile + out tile, double-buffered
    fit = max((vmem_cap - resident - (4 << 20)) // per_row, 8)
    tb = int(max(8, min(_round_up(tb, 8), (fit // 8) * 8)))

    grid = (pl.cdiv(B, tb),)

    vmem_needed = tb * per_row + resident
    vmem_limit = int(min(cap, max(vmem_needed + (8 << 20), 32 << 20)))

    cost = pl.CostEstimate(
        flops=2 * B * D * C_pad,
        transcendentals=0,
        bytes_accessed=(B * D + D * C_pad + C_pad + B * C_pad) * itemsize,
    )

    # TODO(synk): for very large D*C (W^T no longer VMEM-resident) add a K/N grid
    # axis with a pl.when-guarded f32 accumulator; and single-buffer the
    # grid-invariant W/bias blocks (pl.Buffered(1)) / cast inputs to bf16 for
    # v5e's MXU once precision requirements allow.
    out = pl.pallas_call(
        _linear_kernel,
        out_shape=jax.ShapeDtypeStruct((B, C_pad), x.dtype),
        grid=grid,
        in_specs=[
            pl.BlockSpec((tb, D), lambda i: (i, 0)),       # x: pipelined over batch
            pl.BlockSpec((D, C_pad), lambda i: (0, 0)),    # W^T: VMEM-resident
            pl.BlockSpec((1, C_pad), lambda i: (0, 0)),    # bias: VMEM-resident
        ],
        out_specs=pl.BlockSpec((tb, C_pad), lambda i: (i, 0)),
        compiler_params=pltpu.CompilerParams(
            dimension_semantics=("parallel",),
            vmem_limit_bytes=vmem_limit,
        ),
        cost_estimate=cost,
    )(x, w_t, b_p)

    return out if C == C_pad else out[:, :C]


if __name__ == "__main__":
    # Small shapes consistent with the module: batch=8, num_dim=32, num_classes=16.
    B, D, C = 8, 32, 16
    kx, kw, kb = jax.random.split(jax.random.PRNGKey(0), 3)

    x = jax.random.normal(kx, (B, D), dtype=jnp.float32)
    # Deterministic init mimicking PyTorch nn.Linear default: U(-1/sqrt(D), 1/sqrt(D)).
    bound = 1.0 / jnp.sqrt(jnp.float32(D))
    weight = jax.random.uniform(kw, (C, D), minval=-bound, maxval=bound, dtype=jnp.float32)
    bias = jax.random.uniform(kb, (C,), minval=-bound, maxval=bound, dtype=jnp.float32)

    logits = logistic_regression_forward(x, weight, bias)
    jax.block_until_ready(logits)
    ref = x @ weight.T + bias
    assert logits.shape == (B, C)
    assert jnp.allclose(logits, ref, atol=1e-4, rtol=1e-4)

    # Also exercise the batch-tiled path: ragged batch (partial last tile),
    # padded classes, >= 2 grid steps.
    B2, D2, C2 = 1037, 256, 64
    kx2, kw2, kb2 = jax.random.split(jax.random.PRNGKey(1), 3)
    bound2 = 1.0 / jnp.sqrt(jnp.float32(D2))
    x2 = jax.random.normal(kx2, (B2, D2), dtype=jnp.float32)
    w2 = jax.random.uniform(kw2, (C2, D2), minval=-bound2, maxval=bound2, dtype=jnp.float32)
    b2 = jax.random.uniform(kb2, (C2,), minval=-bound2, maxval=bound2, dtype=jnp.float32)

    logits2 = logistic_regression_forward(x2, w2, b2)
    jax.block_until_ready(logits2)
    ref2 = x2 @ w2.T + b2
    assert logits2.shape == (B2, C2)
    assert jnp.allclose(logits2, ref2, atol=2e-4, rtol=2e-4)

    print("KERNEL_OK")
</pallas_src>

<mosaic_0001>
module attributes {stable_mosaic.version = 11 : i64} {
  func.func @_linear_kernel(%arg0: memref<8x32xf32, #tpu.memory_space<vmem>>, %arg1: memref<32x16xf32, #tpu.memory_space<vmem>>, %arg2: memref<1x16xf32, #tpu.memory_space<vmem>>, %arg3: memref<8x16xf32, #tpu.memory_space<vmem>>) attributes {dimension_semantics = [], scalar_prefetch = 0 : i64, scratch_operands = 0 : i64, tpu.core_type = #tpu.core_type<tc>} {
    %c0 = arith.constant 0 : index
    %c0_0 = arith.constant 0 : index
    %0 = vector.load %arg0[%c0, %c0_0] : memref<8x32xf32, #tpu.memory_space<vmem>>, vector<8x32xf32>
    %c0_1 = arith.constant 0 : index
    %c0_2 = arith.constant 0 : index
    %1 = vector.load %arg1[%c0_1, %c0_2] : memref<32x16xf32, #tpu.memory_space<vmem>>, vector<32x16xf32>
    %cst = arith.constant dense<0.000000e+00> : vector<8x16xf32>
    %2 = tpu.matmul %0, %1, %cst {dimension_numbers = #tpu.dot_dimension_numbers<[1], [0], [0], [1], [0, 0, 1, 1], [], []>} : vector<8x32xf32>, vector<32x16xf32>, vector<8x16xf32> -> vector<8x16xf32>
    %c0_3 = arith.constant 0 : index
    %c0_4 = arith.constant 0 : index
    %3 = vector.load %arg2[%c0_3, %c0_4] : memref<1x16xf32, #tpu.memory_space<vmem>>, vector<1x16xf32>
    %4 = vector.broadcast %3 : vector<1x16xf32> to vector<8x16xf32>
    %5 = arith.addf %2, %4 : vector<8x16xf32>
    %c0_5 = arith.constant 0 : index
    %c0_6 = arith.constant 0 : index
    %6 = vector.load %arg3[%c0_5, %c0_6] : memref<8x16xf32, #tpu.memory_space<vmem>>, vector<8x16xf32>
    tpu.vector_store %arg3[%c0_5, %c0_6], %5 {strides = array<i32>} : memref<8x16xf32, #tpu.memory_space<vmem>>, vector<8x16xf32>,
    return
  }
}

</mosaic_0001>

<llo_original>
// kernel: logistic_regression_forward.1
$region0: #{logistic_regression_forward.1}
  #allocation0 [shape = 'u32[]', space=smem, size = 0x4, offset = 0x4, fixed_abs, tag = 'smem constant byte address 0x4 - core index']
  #allocation1 [shape = 'u32[72,128]{1,0:T(1,128)}', space=vmem, size = 0x9000, scoped, tag = 'internal scratch']
  %s0 = inlined_call_operand.vmem [shape: f32[8,32], index: 0, kind: input, shape index: {}]
  %s1 = inlined_call_operand.vmem [shape: f32[32,16], index: 1, kind: input, shape index: {}]
  %s2 = inlined_call_operand.vmem [shape: f32[1,16], index: 2, kind: input, shape index: {}]
  %s3 = inlined_call_operand.hbm [shape: f32[8,16], index: 3, kind: output, shape index: {}]
  %s4 = sld [smem:[#allocation0]]
  $region22: #{logistic_regression_forward.1} parent=0
    _
  %s6 = ssub.s32 1, %s4
  %s7 = scalar_select 0, %s6, %s4
  $region1: #{logistic_regression_forward.1} parent=0
    #allocation2 [shape = 'u8[4096]{0}', space=vmem, size = 0x1000, scoped, tag = 'output window, operand 0, single buffered']
    #allocation3 [shape = 's32[1]{0}', space=sflag, size = 0x4, scoped, tag = 'scoped memory for logistic_regression_forward.1']
    %8 = vsyncpa [#allocation3], 0
    // Predicated region
    $region2: #{logistic_regression_forward.1} parent=1 // pred_check
      _
    $region3: #{logistic_regression_forward.1} parent=1 // pred_check_branch
      %10 = sbr.rel (0) target = $region5
    $region4: #{logistic_regression_forward.1} parent=1 // pred_region
      _
    $region5: #{logistic_regression_forward.1} parent=1 // pred_fallthru
      _
    // Predicated region
    $region6: #{logistic_regression_forward.1} parent=1 // pred_check
      _
    $region7: #{logistic_regression_forward.1} parent=1 // pred_check_branch
      %12 = sbr.rel (0) target = $region9
    $region8: #{logistic_regression_forward.1} parent=1 // pred_region
      _
    $region9: #{logistic_regression_forward.1} parent=1 // pred_fallthru
      _
    // Predicated region
    $region10: #{logistic_regression_forward.1} parent=1 // pred_check
      _
    $region11: #{logistic_regression_forward.1} parent=1 // pred_check_branch
      %14 = sbr.rel (0) target = $region13
    $region12: #{logistic_regression_forward.1} parent=1 // pred_region
      _
    $region13: #{logistic_regression_forward.1} parent=1 // pred_fallthru
      _
    %v15 = vld [vmem:[%s0] sm:$0xff]
    %v16 = vld [vmem:[%s1] sm:$0xff]
    %v17 = vld [vmem:[%s1 + $0x8] sm:$0xff]
    %v18 = vld [vmem:[%s1 + $0x10] sm:$0xff]
    %v19 = vld [vmem:[%s1 + $0x18] sm:$0xff]
    %v20 = vld [vmem:[%s2] sm:$0x1]
    %v22 = vperm.slane %v20, 0
    %vm24 = vcmask 261120
    %v26 = vsel %vm24, %v15, 0
    %28 = vmatpush.msra.mxu0 0.0
    %29 = vmatpush.msra.mxu0 0.0
    %30 = vmatpush.msra.mxu0 0.0
    %31 = vmatpush.msra.mxu0 0.0
    %32 = vmatpush.msra.mxu0 0.0
    %33 = vmatpush.msra.mxu0 0.0
    %34 = vmatpush.msra.mxu0 0.0
    %35 = vmatpush.msra.mxu0 0.0
    %36 = vmatpush.msra.mxu0 0.0
    %37 = vmatpush.msra.mxu0 0.0
    %38 = vmatpush.msra.mxu0 0.0
    %39 = vmatpush.msra.mxu0 0.0
    %40 = vmatpush.msra.mxu0 %v19
    %41 = vmatpush.msra.mxu0 %v18
    %42 = vmatpush.msra.mxu0 %v17
    %43 = vmatpush.msra.mxu0 %v16
    %44 = vmatmul.f32.gmra.mxu0 %v26
    %v45 = vpop.f32.mrf.mxu0
    %v46 = vadd.f32 %v22, %v45
    %47 = vdwg.mxu0
    %vm48 = vcmask 130048
    %49 = vst.msk [vmem:[#allocation2] sm:$0xff] %vm48, %v46
    // Predicated region
    $region14: #{logistic_regression_forward.1} parent=1 // pred_check
      _
    $region15: #{logistic_regression_forward.1} parent=1 // pred_check_branch
      %51 = sbr.rel (0) target = $region17
    $region16: #{logistic_regression_forward.1} parent=1 // pred_region
      %53 = vsyncadd [#allocation3], 0
      %s55 = sshll.u32 [#allocation2], 4
      %s56 = int_to_ptr.vmem [resolvable:$true] %s55
      %s57 = sshll.u32 %s3, 4
      %s58 = int_to_ptr.hbm [resolvable:$true] %s57
      %60 = dma.vmem_to_hbm [thread:$0]  %s56, 128, %s58, [#allocation3]
    $region17: #{logistic_regression_forward.1} parent=1 // pred_fallthru
      _
    // Predicated region
    $region18: #{logistic_regression_forward.1} parent=1 // pred_check
      _
    $region19: #{logistic_regression_forward.1} parent=1 // pred_check_branch
      %62 = sbr.rel (0) target = $region21
    $region20: #{logistic_regression_forward.1} parent=1 // pred_region
      %64 = dma.done [#allocation3], 128
    $region21: #{logistic_regression_forward.1} parent=1 // pred_fallthru
      _
    %65 = vsyncpa [#allocation3], 1

</llo_original>
